<compile_context>
chip_gen: v7x
topology: tpu7x:2x2x1
jax: 0.10.0
libtpu: 0.0.40
codegen_flags: <defaults>
</compile_context>

<pallas_src>
import functools

import numpy as np
import jax
import jax.numpy as jnp
from jax.experimental import pallas as pl
from jax.experimental.pallas import tpu as pltpu


def _round_up(x, m):
    return ((x + m - 1) // m) * m


# ----------------------------- matmul kernels -----------------------------

def _mm_kernel(a_ref, b_ref, bias_ref, o_ref, acc_ref, *, relu):
    k = pl.program_id(2)

    @pl.when(k == 0)
    def _init():
        acc_ref[...] = jnp.zeros_like(acc_ref)

    acc_ref[...] += jnp.dot(a_ref[...], b_ref[...],
                            preferred_element_type=jnp.float32)

    @pl.when(k == pl.num_programs(2) - 1)
    def _fin():
        r = acc_ref[...] + bias_ref[...]
        if relu:
            r = jnp.maximum(r, 0.0)
        o_ref[...] = r.astype(o_ref.dtype)


def _mm_res_kernel(a_ref, b_ref, bias_ref, res_ref, o_ref, acc_ref, *, relu):
    k = pl.program_id(2)

    @pl.when(k == 0)
    def _init():
        acc_ref[...] = jnp.zeros_like(acc_ref)

    acc_ref[...] += jnp.dot(a_ref[...], b_ref[...],
                            preferred_element_type=jnp.float32)

    @pl.when(k == pl.num_programs(2) - 1)
    def _fin():
        r = acc_ref[...] + bias_ref[...] + res_ref[...].astype(jnp.float32)
        if relu:
            r = jnp.maximum(r, 0.0)
        o_ref[...] = r.astype(o_ref.dtype)


def _pick_tk(K):
    """Largest K tile <= 1024 that evenly divides K (K is a multiple of 128)."""
    if K <= 1024:
        return K
    n = -(-K // 1024)
    while not (K % n == 0 and (K // n) % 128 == 0):
        n += 1
    return K // n


def matmul_bias(a, w, bias, *, relu=False, residual=None, out_dtype=jnp.bfloat16):
    """(M,K)@(K,N) + bias [+ residual] [+ ReLU] on the MXU.

    `w` is pre-padded (K,N) bf16 (K,N multiples of 128); `bias` is (1,N) f32.
    bf16 operands, f32 accumulation; grid = (M, N, K) with K as the reduction axis.
    """
    M, K = a.shape
    K2, N = w.shape
    assert K == K2 and K % 128 == 0 and N % 128 == 0
    a = a.astype(jnp.bfloat16)

    tk = _pick_tk(K)
    tn = min(N, 512)
    if M >= 512 and M % 512 == 0:
        bm = 512
    elif M >= 256:
        bm = 256
    else:
        bm = _round_up(M, 8)
    Mp = _round_up(M, bm)
    if Mp != M:
        a = jnp.pad(a, ((0, Mp - M), (0, 0)))

    in_specs = [
        pl.BlockSpec((bm, tk), lambda i, j, k: (i, k)),
        pl.BlockSpec((tk, tn), lambda i, j, k: (k, j)),
        pl.BlockSpec((1, tn), lambda i, j, k: (0, j)),
    ]
    args = [a, w, bias]
    if residual is not None:
        res = residual.astype(jnp.bfloat16)
        if Mp != M:
            res = jnp.pad(res, ((0, Mp - M), (0, 0)))
        in_specs.append(pl.BlockSpec((bm, tn), lambda i, j, k: (i, j)))
        args.append(res)
        kernel = functools.partial(_mm_res_kernel, relu=relu)
    else:
        kernel = functools.partial(_mm_kernel, relu=relu)

    out = pl.pallas_call(
        kernel,
        out_shape=jax.ShapeDtypeStruct((Mp, N), out_dtype),
        grid=(Mp // bm, N // tn, K // tk),
        in_specs=in_specs,
        out_specs=pl.BlockSpec((bm, tn), lambda i, j, k: (i, j)),
        scratch_shapes=[pltpu.VMEM((bm, tn), jnp.float32)],
        compiler_params=pltpu.CompilerParams(
            dimension_semantics=("parallel", "parallel", "arbitrary")),
    )(*args)
    return out[:M] if Mp != M else out


# ------------------- shifted-window (3x3, pad=1) geometry helpers -------------------

def _shifted_window_setup(x, stride, pad_value):
    """Flattened (phase-decimated) NHWC views + per-tap (phase_idx, row_offset)."""
    N, H, W, C = x.shape
    Ho = (H - 1) // stride + 1
    Wo = (W - 1) // stride + 1
    xp = jnp.pad(x, ((0, 0), (1, 1), (1, 1), (0, 0)), constant_values=pad_value)
    if stride == 1:
        Hr, Wr = H + 2, W + 2
        raw = [xp]
        tap_map = tuple((0, di * Wr + dj) for di in range(3) for dj in range(3))
    else:
        # stride 2 (H, W even in this network): 4 parity phases -> contiguous windows
        Hr, Wr = (H + 2) // 2, (W + 2) // 2
        raw = [xp[:, pi::2, pj::2, :] for pi in range(2) for pj in range(2)]
        tap_map = tuple(((di % 2) * 2 + (dj % 2), (di // 2) * Wr + dj // 2)
                        for di in range(3) for dj in range(3))
    img = Hr * Wr
    total = N * img
    L = (N - 1) * img + (Ho - 1) * Wr + Wo
    Lp = _round_up(L, 8)
    phases = [jnp.pad(p.reshape(total, C), ((0, 8), (0, 0)),
                      constant_values=pad_value) for p in raw]
    geom = (N, Hr, Wr, Ho, Wo, total, Lp)
    return phases, tap_map, geom


def _window_extract(out, geom):
    N, Hr, Wr, Ho, Wo, total, Lp = geom
    full = out[:total] if Lp >= total else jnp.pad(out, ((0, total - Lp), (0, 0)))
    return full.reshape(N, Hr, Wr, -1)[:, :Ho, :Wo, :]


# ------------------------- conv3x3 / maxpool kernels -------------------------

def _conv3x3_kernel(*refs, n_phase, tap_map, relu):
    """Direct 3x3 conv: 9 shifted-window matmuls accumulated in a local f32 value."""
    w_ref = refs[n_phase]          # (9, Cinp, 128)  bf16
    b_ref = refs[n_phase + 1]      # (1, 128)        f32
    o_ref = refs[n_phase + 2]      # (Lp, 128)       bf16
    Lp = o_ref.shape[0]
    acc = None
    for t, (p_idx, off) in enumerate(tap_map):
        win = refs[p_idx][off:off + Lp, :]             # (Lp, Cinp) bf16
        d = jnp.dot(win, w_ref[t], preferred_element_type=jnp.float32)
        acc = d if acc is None else acc + d
    r = acc + b_ref[...]
    if relu:
        r = jnp.maximum(r, 0.0)
    o_ref[...] = r.astype(o_ref.dtype)


def conv3x3_bn(x, p, stride, relu=True):
    """3x3 Conv2d pad=1 (BN folded) + ReLU; bf16 in/out, channels kept 128-padded."""
    w, b = p["w"], p["b"]          # (9, cinp, coutp) bf16, (1, coutp) f32
    cinp, coutp = w.shape[1], w.shape[2]
    phases, tap_map, geom = _shifted_window_setup(x, stride, 0.0)
    Lp = geom[-1]
    kernel = functools.partial(_conv3x3_kernel, n_phase=len(phases),
                               tap_map=tap_map, relu=relu)
    in_specs = ([pl.BlockSpec(ph.shape, lambda j: (0, 0)) for ph in phases]
                + [pl.BlockSpec((9, cinp, 128), lambda j: (0, 0, j)),
                   pl.BlockSpec((1, 128), lambda j: (0, j))])
    out = pl.pallas_call(
        kernel,
        out_shape=jax.ShapeDtypeStruct((Lp, coutp), jnp.bfloat16),
        grid=(coutp // 128,),
        in_specs=in_specs,
        out_specs=pl.BlockSpec((Lp, 128), lambda j: (0, j)),
        compiler_params=pltpu.CompilerParams(
            dimension_semantics=("parallel",)),
    )(*phases, w, b)
    return _window_extract(out, geom)


def _maxpool_kernel(*refs, tap_map):
    o_ref = refs[-1]
    Lp = o_ref.shape[0]
    r = None
    for (p_idx, off) in tap_map:
        win = refs[p_idx][off:off + Lp, :]
        r = win if r is None else jnp.maximum(r, win)
    o_ref[...] = r.astype(o_ref.dtype)


def max_pool_3x3_s2_p1(x):
    """3x3/s2/p1 max-pool, fully in bf16 (pad = large negative)."""
    C = x.shape[-1]
    phases, tap_map, geom = _shifted_window_setup(x, 2, -1e30)
    Lp = geom[-1]
    kernel = functools.partial(_maxpool_kernel, tap_map=tap_map)
    out = pl.pallas_call(
        kernel,
        out_shape=jax.ShapeDtypeStruct((Lp, C), jnp.bfloat16),
    )(*phases)
    return _window_extract(out, geom)


# ------------------------- avg pool / l2 norm kernels -------------------------

@functools.lru_cache(maxsize=None)
def _adaptive_pool_matrix(H, W, Oh, Ow):
    P = np.zeros((Oh * Ow, H * W), np.float32)
    for i in range(Oh):
        h0 = (i * H) // Oh
        h1 = -((-(i + 1) * H) // Oh)   # ceil
        for j in range(Ow):
            w0 = (j * W) // Ow
            w1 = -((-(j + 1) * W) // Ow)
            cnt = (h1 - h0) * (w1 - w0)
            for r in range(h0, h1):
                for c in range(w0, w1):
                    P[i * Ow + j, r * W + c] = 1.0 / cnt
    return P


def _avgpool_kernel(p_ref, x_ref, o_ref, *, n):
    p = p_ref[...]
    for i in range(n):
        o_ref[i] = jnp.dot(p, x_ref[i], preferred_element_type=jnp.float32)


def adaptive_avg_pool(x, out_size):
    """nn.AdaptiveAvgPool2d(out_size); single call, N batched inside the kernel."""
    N, H, W, C = x.shape
    OO = out_size * out_size
    P = jnp.asarray(_adaptive_pool_matrix(H, W, out_size, out_size),
                    dtype=jnp.bfloat16)
    kernel = functools.partial(_avgpool_kernel, n=N)
    y = pl.pallas_call(
        kernel,
        out_shape=jax.ShapeDtypeStruct((N, OO, C), jnp.float32),
    )(P, x.reshape(N, H * W, C).astype(jnp.bfloat16))
    return y.reshape(N, out_size, out_size, C)


def _l2norm_kernel(x_ref, o_ref):
    x = x_ref[...]
    ss = jnp.sum(x * x, axis=-1, keepdims=True)
    o_ref[...] = x * jax.lax.rsqrt(jnp.maximum(ss, 1e-24))   # F.normalize (eps=1e-12)


def l2_normalize_rows(x):
    return pl.pallas_call(
        _l2norm_kernel,
        out_shape=jax.ShapeDtypeStruct(x.shape, jnp.float32),
    )(x)


# ------------------------- conv wrappers -------------------------

def _im2col(x, kh, kw, stride, pad):
    N, H, W, C = x.shape
    xp = jnp.pad(x, ((0, 0), (pad, pad), (pad, pad), (0, 0)))
    Ho = (H + 2 * pad - kh) // stride + 1
    Wo = (W + 2 * pad - kw) // stride + 1
    cols = []
    for i in range(kh):
        for j in range(kw):
            cols.append(xp[:, i:i + stride * Ho:stride, j:j + stride * Wo:stride, :])
    patches = jnp.stack(cols, axis=3)        # (N, Ho, Wo, kh*kw, C)
    return patches.reshape(N * Ho * Wo, kh * kw * C), Ho, Wo


def stem_conv(x, p):
    """7x7/s2/p3 stem conv + BN + ReLU; output kept lane-dense at 128 channels."""
    N = x.shape[0]
    cols, Ho, Wo = _im2col(x, 7, 7, 2, 3)
    Kp = p["w"].shape[0]
    cols = jnp.pad(cols, ((0, 0), (0, Kp - cols.shape[1]))).astype(jnp.bfloat16)
    y = matmul_bias(cols, p["w"], p["b"], relu=True)
    return y.reshape(N, Ho, Wo, p["w"].shape[1])


def conv1x1_bn(x, p, relu, residual=None):
    N, H, W, C = x.shape
    y = matmul_bias(x.reshape(N * H * W, C), p["w"], p["b"], relu=relu,
                    residual=residual)
    return y.reshape(N, H, W, -1)


# ------------------------- ResNet50 / CModel forward -------------------------

def bottleneck(x, p, stride):
    out = conv1x1_bn(x, p["conv1"], relu=True)
    out = conv3x3_bn(out, p["conv2"], stride, relu=True)
    if "down" in p:
        xs = x[:, ::stride, ::stride, :] if stride > 1 else x
        identity = conv1x1_bn(xs, p["down"], relu=False)
    else:
        identity = x
    # conv3 + BN(folded) + residual add + ReLU fused into one matmul epilogue.
    N, H, W, Cp = out.shape
    y = matmul_bias(out.reshape(N * H * W, Cp), p["conv3"]["w"], p["conv3"]["b"],
                    relu=True, residual=identity.reshape(N * H * W, -1))
    return y.reshape(N, H, W, -1)


def run_layer(x, blocks, first_stride):
    for i, bp in enumerate(blocks):
        x = bottleneck(x, bp, first_stride if i == 0 else 1)
    return x


def pooling_module(x, p):
    """Pooling: 1x1 conv (with bias) + AdaptiveAvgPool2d(7)."""
    N, H, W, C = x.shape
    y = matmul_bias(x.reshape(-1, C), p["w"], p["b"], relu=False)
    return adaptive_avg_pool(y.reshape(N, H, W, -1), 7)


def extract_features(x_nchw, P):
    x = jnp.transpose(x_nchw, (0, 2, 3, 1)).astype(jnp.float32)   # NCHW -> NHWC
    x = stem_conv(x, P["stem"])                                   # conv1+bn1+relu (128 ch)
    x = max_pool_3x3_s2_p1(x)                                     # maxpool (bf16)
    f1 = run_layer(x, P["layer1"], 1)       # 256 ch
    f2 = run_layer(f1, P["layer2"], 2)      # 512 ch
    f3 = run_layer(f2, P["layer3"], 2)      # 1024 ch
    f4 = run_layer(f3, P["layer4"], 2)      # 2048 ch
    a1 = adaptive_avg_pool(f1, 7)
    a2 = adaptive_avg_pool(f2, 7)
    a3 = pooling_module(f3, P["pool1"])
    a4 = pooling_module(f4, P["pool2"])
    return jnp.concatenate([a1, a2, a3, a4], axis=-1)             # (N,7,7,1792) f32


def projector(h, P):
    N, Ho, Wo, C = h.shape
    g = jnp.mean(h.reshape(N, Ho * Wo, C), axis=1)                # AdaptiveAvgPool2d(1)+Flatten
    y = matmul_bias(g.astype(jnp.bfloat16), P["fc1_w"], P["fc1_b"], relu=True)
    z = matmul_bias(y, P["fc2_w"], P["fc2_b"], relu=False, out_dtype=jnp.float32)
    return z


def cmodel_forward(dist, ref, P):
    B = dist.shape[0]
    # Both inputs run through the backbone as one batch (eval-mode BN => identical
    # per-sample results, half the kernel launches, better MXU utilization).
    x = jnp.concatenate([dist, ref], axis=0)
    fea = extract_features(x, P)                                  # (2B,7,7,1792) f32
    C = fea.shape[-1]
    h = l2_normalize_rows(fea.reshape(-1, C)).reshape(fea.shape)
    z = projector(h, P)
    z1, z2 = z[:B], z[B:]
    fea1_nchw = jnp.transpose(fea[:B], (0, 3, 1, 2))              # back to NCHW
    return z1, z2, fea1_nchw


# ------------------------- deterministic parameter init -------------------------

class _KeyGen:
    def __init__(self, seed):
        self._key = jax.random.PRNGKey(seed)

    def __call__(self):
        self._key, k = jax.random.split(self._key)
        return k


def _bn_fold(kg, cout):
    gamma = 1.0 + 0.1 * jax.random.normal(kg(), (cout,), jnp.float32)
    beta = 0.1 * jax.random.normal(kg(), (cout,), jnp.float32)
    mean = 0.1 * jax.random.normal(kg(), (cout,), jnp.float32)
    var = 1.0 + 0.1 * jax.random.uniform(kg(), (cout,), jnp.float32)
    s = gamma / jnp.sqrt(var + 1e-5)
    return s, beta - mean * s


def init_conv_bn(kg, kh, kw, cin, cout):
    """Conv + eval-mode BN fold; weights pre-padded/reshaped once for the kernels."""
    w = jax.random.normal(kg(), (kh, kw, cin, cout), jnp.float32) / np.sqrt(kh * kw * cin)
    s, b = _bn_fold(kg, cout)
    w = w * s
    cin_p = _round_up(cin, 128)
    cout_p = _round_up(cout, 128)
    wp = jnp.pad(w, ((0, 0), (0, 0), (0, cin_p - cin), (0, cout_p - cout)))
    wk = wp.reshape(cin_p, cout_p) if kh == 1 else wp.reshape(kh * kw, cin_p, cout_p)
    bp = jnp.pad(b, (0, cout_p - cout)).reshape(1, cout_p)
    return {"w": wk.astype(jnp.bfloat16), "b": bp.astype(jnp.float32)}


def init_stem(kg):
    w = jax.random.normal(kg(), (7, 7, 3, 64), jnp.float32) / np.sqrt(147)
    s, b = _bn_fold(kg, 64)
    w = (w * s).reshape(147, 64)
    Kp = _round_up(147, 128)                                       # 256
    wk = jnp.pad(w, ((0, Kp - 147), (0, 128 - 64)))
    bp = jnp.pad(b, (0, 128 - 64)).reshape(1, 128)
    return {"w": wk.astype(jnp.bfloat16), "b": bp.astype(jnp.float32)}


def init_linear(kg, cin, cout, bn=False):
    w = jax.random.normal(kg(), (cin, cout), jnp.float32) / np.sqrt(cin)
    b = 0.01 * jax.random.normal(kg(), (cout,), jnp.float32)
    if bn:                                                         # Linear + folded BN1d
        s, b2 = _bn_fold(kg, cout)
        w = w * s
        b = b * s + b2
    return {"w": w.astype(jnp.bfloat16), "b": b.reshape(1, cout).astype(jnp.float32)}


def init_layer(kg, cin, planes, blocks):
    out = []
    for blk_i in range(blocks):
        c_in = cin if blk_i == 0 else planes * 4
        blk = {
            "conv1": init_conv_bn(kg, 1, 1, c_in, planes),
            "conv2": init_conv_bn(kg, 3, 3, planes, planes),
            "conv3": init_conv_bn(kg, 1, 1, planes, planes * 4),
        }
        if blk_i == 0:
            blk["down"] = init_conv_bn(kg, 1, 1, c_in, planes * 4)
        out.append(blk)
    return out


def init_params(seed=0, out_dim=128):
    kg = _KeyGen(seed)
    P = {}
    P["stem"] = init_stem(kg)
    P["layer1"] = init_layer(kg, 64, 64, 3)
    P["layer2"] = init_layer(kg, 256, 128, 4)
    P["layer3"] = init_layer(kg, 512, 256, 6)
    P["layer4"] = init_layer(kg, 1024, 512, 3)
    P["pool1"] = init_linear(kg, 1024, 512)
    P["pool2"] = init_linear(kg, 2048, 512)
    fc1 = init_linear(kg, 1792, 1024, bn=True)
    P["fc1_w"], P["fc1_b"] = fc1["w"], fc1["b"]
    fc2 = init_linear(kg, 1024, out_dim)
    P["fc2_w"], P["fc2_b"] = fc2["w"], fc2["b"]
    return P


# ------------------------- small numerical self-checks -------------------------

def _self_check():
    kg = _KeyGen(123)
    # matmul + bias + ReLU vs XLA reference (bf16-rounded operands, loose tolerance).
    a = jax.random.normal(kg(), (64, 256), jnp.float32).astype(jnp.bfloat16)
    w = (jax.random.normal(kg(), (256, 128), jnp.float32) / 16.0).astype(jnp.bfloat16)
    b = 0.1 * jax.random.normal(kg(), (128,), jnp.float32)
    got = matmul_bias(a, w, b.reshape(1, 128), relu=True).astype(jnp.float32)
    ref = jnp.maximum(a.astype(jnp.float32) @ w.astype(jnp.float32) + b, 0.0)
    np.testing.assert_allclose(np.asarray(got), np.asarray(ref), rtol=0.1, atol=0.1)

    # shifted-window 3x3 conv (stride 1 and 2) vs lax.conv_general_dilated.
    cin, cout = 128, 256
    x = jax.random.normal(kg(), (2, 8, 8, cin), jnp.float32).astype(jnp.bfloat16)
    w3 = (jax.random.normal(kg(), (3, 3, cin, cout), jnp.float32)
          / np.sqrt(9 * cin)).astype(jnp.bfloat16)
    b3 = 0.1 * jax.random.normal(kg(), (cout,), jnp.float32)
    p = {"w": w3.reshape(9, cin, cout), "b": b3.reshape(1, cout)}
    for stride in (1, 2):
        got = conv3x3_bn(x, p, stride, relu=True).astype(jnp.float32)
        ref = jax.lax.conv_general_dilated(
            x.astype(jnp.float32), w3.astype(jnp.float32),
            (stride, stride), ((1, 1), (1, 1)),
            dimension_numbers=("NHWC", "HWIO", "NHWC"))
        ref = jnp.maximum(ref + b3, 0.0)
        np.testing.assert_allclose(np.asarray(got), np.asarray(ref), rtol=0.1, atol=0.1)


if __name__ == "__main__":
    _self_check()

    key = jax.random.PRNGKey(0)
    k1, k2 = jax.random.split(key)
    # small inputs: batch=2, 3-channel 64x64 images (NCHW, like the PyTorch module)
    dist = jax.random.normal(k1, (2, 3, 64, 64), jnp.float32)
    ref = jax.random.normal(k2, (2, 3, 64, 64), jnp.float32)
    params = init_params(seed=0, out_dim=128)

    fwd = jax.jit(cmodel_forward)
    z1, z2, fea1 = fwd(dist, ref, params)
    jax.block_until_ready((z1, z2, fea1))

    assert z1.shape == (2, 128) and z2.shape == (2, 128)
    assert fea1.shape == (2, 1792, 7, 7)
    assert np.all(np.isfinite(np.asarray(z1))) and np.all(np.isfinite(np.asarray(z2)))
    assert np.all(np.isfinite(np.asarray(fea1)))
    print("KERNEL_OK")
</pallas_src>

<mosaic_0001>
module attributes {stable_mosaic.version = 11 : i64} {
  func.func @_mm_kernel(%arg0: i32, %arg1: i32, %arg2: i32, %arg3: memref<64x256xbf16, #tpu.memory_space<vmem>>, %arg4: memref<256x128xbf16, #tpu.memory_space<vmem>>, %arg5: memref<1x128xf32, #tpu.memory_space<vmem>>, %arg6: memref<64x128xbf16, #tpu.memory_space<vmem>>, %arg7: memref<64x128xf32, #tpu.memory_space<vmem>>) attributes {dimension_semantics = [#tpu.dimension_semantics<parallel>, #tpu.dimension_semantics<parallel>, #tpu.dimension_semantics<arbitrary>], iteration_bounds = array<i64: 1, 1, 1>, scalar_prefetch = 0 : i64, scratch_operands = 1 : i64, tpu.core_type = #tpu.core_type<tc>, window_params = [{transform_indices = @transform_0, window_bounds = array<i64: 64, 256>}, {transform_indices = @transform_1, window_bounds = array<i64: 256, 128>}, {transform_indices = @transform_2, window_bounds = array<i64: 1, 128>}, {transform_indices = @transform_3, window_bounds = array<i64: 64, 128>}]} {
    %c0_i32 = arith.constant 0 : i32
    %0 = arith.cmpi eq, %arg2, %c0_i32 : i32
    %1 = arith.extui %0 : i1 to i32
    %c0_i32_0 = arith.constant 0 : i32
    %2 = arith.cmpi ne, %1, %c0_i32_0 : i32
    scf.if %2 {
      %cst_10 = arith.constant 0.000000e+00 : f32
      %12 = vector.broadcast %cst_10 : f32 to vector<64x128xf32>
      %c0_11 = arith.constant 0 : index
      %c0_12 = arith.constant 0 : index
      %13 = vector.load %arg7[%c0_11, %c0_12] : memref<64x128xf32, #tpu.memory_space<vmem>>, vector<64x128xf32>
      tpu.vector_store %arg7[%c0_11, %c0_12], %12 {strides = array<i32>} : memref<64x128xf32, #tpu.memory_space<vmem>>, vector<64x128xf32>,
    } else {
    }
    %c0 = arith.constant 0 : index
    %c0_1 = arith.constant 0 : index
    %3 = vector.load %arg7[%c0, %c0_1] : memref<64x128xf32, #tpu.memory_space<vmem>>, vector<64x128xf32>
    %c0_2 = arith.constant 0 : index
    %c0_3 = arith.constant 0 : index
    %4 = vector.load %arg3[%c0_2, %c0_3] : memref<64x256xbf16, #tpu.memory_space<vmem>>, vector<64x256xbf16>
    %c0_4 = arith.constant 0 : index
    %c0_5 = arith.constant 0 : index
    %5 = vector.load %arg4[%c0_4, %c0_5] : memref<256x128xbf16, #tpu.memory_space<vmem>>, vector<256x128xbf16>
    %cst = arith.constant dense<0.000000e+00> : vector<64x128xf32>
    %6 = tpu.matmul %4, %5, %cst {dimension_numbers = #tpu.dot_dimension_numbers<[1], [0], [0], [1], [0, 0, 1, 1], [], []>} : vector<64x256xbf16>, vector<256x128xbf16>, vector<64x128xf32> -> vector<64x128xf32>
    %7 = arith.addf %3, %6 : vector<64x128xf32>
    %c0_6 = arith.constant 0 : index
    %c0_7 = arith.constant 0 : index
    %8 = vector.load %arg7[%c0_6, %c0_7] : memref<64x128xf32, #tpu.memory_space<vmem>>, vector<64x128xf32>
    tpu.vector_store %arg7[%c0_6, %c0_7], %7 {strides = array<i32>} : memref<64x128xf32, #tpu.memory_space<vmem>>, vector<64x128xf32>,
    %c0_i32_8 = arith.constant 0 : i32
    %9 = arith.cmpi eq, %arg2, %c0_i32_8 : i32
    %10 = arith.extui %9 : i1 to i32
    %c0_i32_9 = arith.constant 0 : i32
    %11 = arith.cmpi ne, %10, %c0_i32_9 : i32
    scf.if %11 {
      %c0_10 = arith.constant 0 : index
      %c0_11 = arith.constant 0 : index
      %12 = vector.load %arg7[%c0_10, %c0_11] : memref<64x128xf32, #tpu.memory_space<vmem>>, vector<64x128xf32>
      %c0_12 = arith.constant 0 : index
      %c0_13 = arith.constant 0 : index
      %13 = vector.load %arg5[%c0_12, %c0_13] : memref<1x128xf32, #tpu.memory_space<vmem>>, vector<1x128xf32>
      %14 = vector.broadcast %13 : vector<1x128xf32> to vector<64x128xf32>
      %15 = arith.addf %12, %14 : vector<64x128xf32>
      %cst_14 = arith.constant 0.000000e+00 : f32
      %16 = vector.broadcast %cst_14 : f32 to vector<64x128xf32>
      %17 = arith.maximumf %15, %16 : vector<64x128xf32>
      %18 = arith.truncf %17 : vector<64x128xf32> to vector<64x128xbf16>
      %c0_15 = arith.constant 0 : index
      %c0_16 = arith.constant 0 : index
      %19 = vector.load %arg6[%c0_15, %c0_16] : memref<64x128xbf16, #tpu.memory_space<vmem>>, vector<64x128xbf16>
      tpu.vector_store %arg6[%c0_15, %c0_16], %18 {strides = array<i32>} : memref<64x128xbf16, #tpu.memory_space<vmem>>, vector<64x128xbf16>,
    } else {
    }
    return
  }
  func.func @transform_0(%arg0: i32, %arg1: i32, %arg2: i32) -> (i32, i32) {
    %c0_i32 = arith.constant 0 : i32
    return %arg0, %arg2 : i32, i32
  }
  func.func @transform_1(%arg0: i32, %arg1: i32, %arg2: i32) -> (i32, i32) {
    %c0_i32 = arith.constant 0 : i32
    return %arg2, %arg1 : i32, i32
  }
  func.func @transform_2(%arg0: i32, %arg1: i32, %arg2: i32) -> (i32, i32) {
    %c0_i32 = arith.constant 0 : i32
    %c0_i32_0 = arith.constant 0 : i32
    return %c0_i32, %arg1 : i32, i32
  }
  func.func @transform_3(%arg0: i32, %arg1: i32, %arg2: i32) -> (i32, i32) {
    %c0_i32 = arith.constant 0 : i32
    return %arg0, %arg1 : i32, i32
  }
}

</mosaic_0001>

<llo_original>
// kernel: tpu_custom_call.1
$region0: #{tpu_custom_call.1}
  #allocation0 [shape = 'u32[]', space=smem, size = 0x4, offset = 0x4, fixed_abs, tag = 'smem constant byte address 0x4 - core index']
  #allocation1 [shape = 'u32[144,128]{1,0:T(1,128)}', space=vmem, size = 0x12000, scoped, tag = 'internal scratch']
  #allocation2 [shape = 'f32[64,128]{1,0:T(8,128)}', space=vmem, size = 0x8000, scoped, tag = 'scratch operand']
  %s0 = inlined_call_operand.hbm [shape: bf16[64,256], index: 0, kind: input, shape index: {}]
  %s1 = inlined_call_operand.hbm [shape: bf16[256,128], index: 1, kind: input, shape index: {}]
  %s2 = inlined_call_operand.vmem [shape: f32[1,128], index: 2, kind: input, shape index: {}]
  %s3 = inlined_call_operand.hbm [shape: bf16[64,128], index: 3, kind: output, shape index: {}]
  %s4 = sld [smem:[#allocation0]]
  $region38: #{tpu_custom_call.1} parent=0
    _
  %s6 = ssub.s32 1, %s4
  %s7 = scalar_select 0, %s6, %s4
  $region1: #{tpu_custom_call.1} parent=0
    #allocation3 [shape = 'u8[32768]{0}', space=vmem, size = 0x8000, scoped, tag = 'input window, operand 0, single buffered']
    #allocation4 [shape = 's32[1]{0}', space=sflag, size = 0x4, scoped, tag = 'scoped memory for tpu_custom_call.1']
    #allocation5 [shape = 's32[1]{0}', space=sflag, size = 0x4, scoped, tag = 'scoped memory for tpu_custom_call.1']
    #allocation6 [shape = 'u8[65536]{0}', space=vmem, size = 0x10000, scoped, tag = 'input window, operand 1, single buffered']
    #allocation7 [shape = 's32[1]{0}', space=sflag, size = 0x4, scoped, tag = 'scoped memory for tpu_custom_call.1']
    #allocation8 [shape = 'u8[16384]{0}', space=vmem, size = 0x4000, scoped, tag = 'output window, operand 0, single buffered']
    %8 = vsyncpa [#allocation4], 0
    %9 = vsyncpa [#allocation7], 0
    %10 = vsyncpa [#allocation5], 0
    // Predicated region
    $region2: #{tpu_custom_call.1} parent=1 // pred_check
      _
    $region3: #{tpu_custom_call.1} parent=1 // pred_check_branch
      %12 = sbr.rel (0) target = $region5
    $region4: #{tpu_custom_call.1} parent=1 // pred_region
      %s14 = ssub.s32 1024, 1024
      %15 = vsyncadd [#allocation4], %s14
      %s16 = sshll.u32 [#allocation3], 4
      %s17 = int_to_ptr.vmem [resolvable:$true] %s16
      %22 = dma.hbm_to_vmem [thread:$0]  %s0, 1024, %s17, [#allocation4], 128, 128, 8
    $region5: #{tpu_custom_call.1} parent=1 // pred_fallthru
      _
    // Predicated region
    $region6: #{tpu_custom_call.1} parent=1 // pred_check
      _
    $region7: #{tpu_custom_call.1} parent=1 // pred_check_branch
      %24 = sbr.rel (0) target = $region9
    $region8: #{tpu_custom_call.1} parent=1 // pred_region
      %s26 = ssub.s32 2048, 2048
      %27 = vsyncadd [#allocation7], %s26
      %s28 = sshll.u32 [#allocation6], 4
      %s29 = int_to_ptr.vmem [resolvable:$true] %s28
      %34 = dma.hbm_to_vmem [thread:$0]  %s1, 2048, %s29, [#allocation7], 64, 64, 4
    $region9: #{tpu_custom_call.1} parent=1 // pred_fallthru
      _
    // Predicated region
    $region10: #{tpu_custom_call.1} parent=1 // pred_check
      _
    $region11: #{tpu_custom_call.1} parent=1 // pred_check_branch
      %36 = sbr.rel (0) target = $region13
    $region12: #{tpu_custom_call.1} parent=1 // pred_region
      _
    $region13: #{tpu_custom_call.1} parent=1 // pred_fallthru
      _
    // Predicated region
    $region14: #{tpu_custom_call.1} parent=1 // pred_check
      _
    $region15: #{tpu_custom_call.1} parent=1 // pred_check_branch
      %38 = sbr.rel (0) target = $region17
    $region16: #{tpu_custom_call.1} parent=1 // pred_region
      %39 = dma.done [#allocation4], 1024
    $region17: #{tpu_custom_call.1} parent=1 // pred_fallthru
      _
    // Predicated region
    $region18: #{tpu_custom_call.1} parent=1 // pred_check
      _
    $region19: #{tpu_custom_call.1} parent=1 // pred_check_branch
      %41 = sbr.rel (0) target = $region21
    $region20: #{tpu_custom_call.1} parent=1 // pred_region
      %42 = dma.done [#allocation7], 2048
    $region21: #{tpu_custom_call.1} parent=1 // pred_fallthru
      _
    %p44 = scmp.eq.s32.totalorder 0, 0
    // Predicated region
    $region22: #{tpu_custom_call.1} parent=1 // pred_check
      %p45 = pneg %p44
    $region23: #{tpu_custom_call.1} parent=1 // pred_check_branch
      %47 = sbr.rel (%p45) target = $region25
    $region24: #{tpu_custom_call.1} parent=1 // pred_region
      %48 = vst [vmem:[#allocation2] sm:$0xff] 0.0
      %49 = vst [vmem:[#allocation2 + $0x8] sm:$0xff] 0.0
      %50 = vst [vmem:[#allocation2 + $0x10] sm:$0xff] 0.0
      %51 = vst [vmem:[#allocation2 + $0x18] sm:$0xff] 0.0
      %52 = vst [vmem:[#allocation2 + $0x20] sm:$0xff] 0.0
      %53 = vst [vmem:[#allocation2 + $0x28] sm:$0xff] 0.0
      %54 = vst [vmem:[#allocation2 + $0x30] sm:$0xff] 0.0
      %55 = vst [vmem:[#allocation2 + $0x38] sm:$0xff] 0.0
    $region25: #{tpu_custom_call.1} parent=1 // pred_fallthru
      _
    %v56 = vld [vmem:[#allocation2] sm:$0xff]
    %v57 = vld [vmem:[#allocation2 + $0x8] sm:$0xff]
    %v58 = vld [vmem:[#allocation2 + $0x10] sm:$0xff]
    %v59 = vld [vmem:[#allocation2 + $0x18] sm:$0xff]
    %v60 = vld [vmem:[#allocation2 + $0x20] sm:$0xff]
    %v61 = vld [vmem:[#allocation2 + $0x28] sm:$0xff]
    %v62 = vld [vmem:[#allocation2 + $0x30] sm:$0xff]
    %v63 = vld [vmem:[#allocation2 + $0x38] sm:$0xff]
    %v64 = vld [vmem:[#allocation3] sm:$0xff]
    %v65 = vld [vmem:[#allocation3 + $0x8] sm:$0xff]
    %v66 = vld [vmem:[#allocation3 + $0x10] sm:$0xff]
    %v67 = vld [vmem:[#allocation3 + $0x18] sm:$0xff]
    %v68 = vld [vmem:[#allocation3 + $0x20] sm:$0xff]
    %v69 = vld [vmem:[#allocation3 + $0x28] sm:$0xff]
    %v70 = vld [vmem:[#allocation3 + $0x30] sm:$0xff]
    %v71 = vld [vmem:[#allocation3 + $0x38] sm:$0xff]
    %v72 = vld [vmem:[#allocation6] sm:$0xf]
    %v73 = vld [vmem:[#allocation6 + $0x4] sm:$0xf]
    %v74 = vld [vmem:[#allocation6 + $0x8] sm:$0xf]
    %v75 = vld [vmem:[#allocation6 + $0xc] sm:$0xf]
    %v76 = vld [vmem:[#allocation6 + $0x10] sm:$0xf]
    %v77 = vld [vmem:[#allocation6 + $0x14] sm:$0xf]
    %v78 = vld [vmem:[#allocation6 + $0x18] sm:$0xf]
    %v79 = vld [vmem:[#allocation6 + $0x1c] sm:$0xf]
    %v80 = vld [vmem:[#allocation6 + $0x20] sm:$0xf]
    %v81 = vld [vmem:[#allocation6 + $0x24] sm:$0xf]
    %v82 = vld [vmem:[#allocation6 + $0x28] sm:$0xf]
    %v83 = vld [vmem:[#allocation6 + $0x2c] sm:$0xf]
    %v84 = vld [vmem:[#allocation6 + $0x30] sm:$0xf]
    %v85 = vld [vmem:[#allocation6 + $0x34] sm:$0xf]
    %v86 = vld [vmem:[#allocation6 + $0x38] sm:$0xf]
    %v87 = vld [vmem:[#allocation6 + $0x3c] sm:$0xf]
    %v88 = vld [vmem:[#allocation6 + $0x40] sm:$0xf]
    %v89 = vld [vmem:[#allocation6 + $0x44] sm:$0xf]
    %v90 = vld [vmem:[#allocation6 + $0x48] sm:$0xf]
    %v91 = vld [vmem:[#allocation6 + $0x4c] sm:$0xf]
    %v92 = vld [vmem:[#allocation6 + $0x50] sm:$0xf]
    %v93 = vld [vmem:[#allocation6 + $0x54] sm:$0xf]
    %v94 = vld [vmem:[#allocation6 + $0x58] sm:$0xf]
    %v95 = vld [vmem:[#allocation6 + $0x5c] sm:$0xf]
    %v96 = vld [vmem:[#allocation6 + $0x60] sm:$0xf]
    %v97 = vld [vmem:[#allocation6 + $0x64] sm:$0xf]
    %v98 = vld [vmem:[#allocation6 + $0x68] sm:$0xf]
    %v99 = vld [vmem:[#allocation6 + $0x6c] sm:$0xf]
    %v100 = vld [vmem:[#allocation6 + $0x70] sm:$0xf]
    %v101 = vld [vmem:[#allocation6 + $0x74] sm:$0xf]
    %v102 = vld [vmem:[#allocation6 + $0x78] sm:$0xf]
    %v103 = vld [vmem:[#allocation6 + $0x7c] sm:$0xf]
    %v112 = vunpack.c.l.b16 %v64
    %v113 = vunpack.c.h.b16 %v64
    %v114 = vunpack.c.l.b16 %v65
    %v115 = vunpack.c.h.b16 %v65
    %v116 = vunpack.c.l.b16 %v66
    %v117 = vunpack.c.h.b16 %v66
    %v118 = vunpack.c.l.b16 %v67
    %v119 = vunpack.c.h.b16 %v67
    %v120 = vunpack.c.l.b16 %v68
    %v121 = vunpack.c.h.b16 %v68
    %v122 = vunpack.c.l.b16 %v69
    %v123 = vunpack.c.h.b16 %v69
    %v124 = vunpack.c.l.b16 %v70
    %v125 = vunpack.c.h.b16 %v70
    %v126 = vunpack.c.l.b16 %v71
    %v127 = vunpack.c.h.b16 %v71
    %v128 = vpack.c.b16 %v114, %v112
    %v129 = vpack.c.b16 %v115, %v113
    %v130 = vpack.c.b16 %v118, %v116
    %v131 = vpack.c.b16 %v119, %v117
    %v132 = vpack.c.b16 %v122, %v120
    %v133 = vpack.c.b16 %v123, %v121
    %v134 = vpack.c.b16 %v126, %v124
    %v135 = vpack.c.b16 %v127, %v125
    %v176 = vunpack.c.l.b16 %v72
    %v177 = vunpack.c.l.b16 %v73
    %v178 = vunpack.c.l.b16 %v74
    %v179 = vunpack.c.l.b16 %v75
    %v180 = vunpack.c.l.b16 %v76
    %v181 = vunpack.c.l.b16 %v77
    %v182 = vunpack.c.l.b16 %v78
    %v183 = vunpack.c.l.b16 %v79
    %v184 = vunpack.c.l.b16 %v80
    %v185 = vunpack.c.l.b16 %v81
    %v186 = vunpack.c.l.b16 %v82
    %v187 = vunpack.c.l.b16 %v83
    %v188 = vunpack.c.l.b16 %v84
    %v189 = vunpack.c.l.b16 %v85
    %v190 = vunpack.c.l.b16 %v86
    %v191 = vunpack.c.l.b16 %v87
    %v192 = vunpack.c.l.b16 %v88
    %v193 = vunpack.c.l.b16 %v89
    %v194 = vunpack.c.l.b16 %v90
    %v195 = vunpack.c.l.b16 %v91
    %v196 = vunpack.c.l.b16 %v92
    %v197 = vunpack.c.l.b16 %v93
    %v198 = vunpack.c.l.b16 %v94
    %v199 = vunpack.c.l.b16 %v95
    %v200 = vunpack.c.l.b16 %v96
    %v201 = vunpack.c.l.b16 %v97
    %v202 = vunpack.c.l.b16 %v98
    %v203 = vunpack.c.l.b16 %v99
    %v204 = vunpack.c.l.b16 %v100
    %v205 = vunpack.c.l.b16 %v101
    %v206 = vunpack.c.l.b16 %v102
    %v207 = vunpack.c.l.b16 %v103
    %v208 = vpack.c.b16 %v177, %v176
    %v209 = vpack.c.b16 %v179, %v178
    %v210 = vpack.c.b16 %v181, %v180
    %v211 = vpack.c.b16 %v183, %v182
    %v212 = vpack.c.b16 %v185, %v184
    %v213 = vpack.c.b16 %v187, %v186
    %v214 = vpack.c.b16 %v189, %v188
    %v215 = vpack.c.b16 %v191, %v190
    %v216 = vpack.c.b16 %v193, %v192
    %v217 = vpack.c.b16 %v195, %v194
    %v218 = vpack.c.b16 %v197, %v196
    %v219 = vpack.c.b16 %v199, %v198
    %v220 = vpack.c.b16 %v201, %v200
    %v221 = vpack.c.b16 %v203, %v202
    %v222 = vpack.c.b16 %v205, %v204
    %v223 = vpack.c.b16 %v207, %v206
    %240 = vmatprep.subr.bf16.mxu0 0
    %241 = vmatpush1.bf16.msra.mxu0 %v208
    %242 = vmatprep.subr.bf16.mxu0 0
    %243 = vmatpush1.bf16.msra.mxu0 %v209
    %244 = vmatprep.subr.bf16.mxu0 0
    %245 = vmatpush1.bf16.msra.mxu0 %v210
    %246 = vmatprep.subr.bf16.mxu0 0
    %247 = vmatpush1.bf16.msra.mxu0 %v211
    %248 = vmatprep.subr.bf16.mxu0 0
    %249 = vmatpush1.bf16.msra.mxu0 %v212
    %250 = vmatprep.subr.bf16.mxu0 0
    %251 = vmatpush1.bf16.msra.mxu0 %v213
    %252 = vmatprep.subr.bf16.mxu0 0
    %253 = vmatpush1.bf16.msra.mxu0 %v214
    %254 = vmatprep.subr.bf16.mxu0 0
    %255 = vmatpush1.bf16.msra.mxu0 %v215
    %256 = vmatprep.subr.bf16.mxu0 0
    %257 = vmatpush1.bf16.msra.mxu0 %v216
    %258 = vmatprep.subr.bf16.mxu0 0
    %259 = vmatpush1.bf16.msra.mxu0 %v217
    %260 = vmatprep.subr.bf16.mxu0 0
    %261 = vmatpush1.bf16.msra.mxu0 %v218
    %262 = vmatprep.subr.bf16.mxu0 0
    %263 = vmatpush1.bf16.msra.mxu0 %v219
    %264 = vmatprep.subr.bf16.mxu0 0
    %265 = vmatpush1.bf16.msra.mxu0 %v220
    %266 = vmatprep.subr.bf16.mxu0 0
    %267 = vmatpush1.bf16.msra.mxu0 %v221
    %268 = vmatprep.subr.bf16.mxu0 0
    %269 = vmatpush1.bf16.msra.mxu0 %v222
    %270 = vmatprep.subr.bf16.mxu0 0
    %271 = vmatpush1.bf16.msra.mxu0 %v223
    %272 = vmatprep.mubr.bf16.mxu0 %v129
    %273 = vmatmul.mubr.bf16.gmra.mrb[0].mxu0 %v128
    %v274 = vpop.f32.mrb[0].mxu0
    %v275 = vadd.f32 0.0, %v274
    %v276 = vpop.f32.mrb[0].mxu0
    %v277 = vpop.f32.mrb[0].mxu0
    %v278 = vadd.f32 0.0, %v277
    %v279 = vpop.f32.mrb[0].mxu0
    %280 = vmatprep.mubr.bf16.mxu0 %v131
    %281 = vmatmul.mubr.bf16.gmra.mrb[0].mxu0 %v130
    %v282 = vpop.f32.mrb[0].mxu0
    %v283 = vadd.f32 0.0, %v282
    %v284 = vpop.f32.mrb[0].mxu0
    %v285 = vpop.f32.mrb[0].mxu0
    %v286 = vadd.f32 0.0, %v285
    %v287 = vpop.f32.mrb[0].mxu0
    %288 = vmatprep.mubr.bf16.mxu0 %v133
    %289 = vmatmul.mubr.bf16.gmra.mrb[0].mxu0 %v132
    %v290 = vpop.f32.mrb[0].mxu0
    %v291 = vadd.f32 0.0, %v290
    %v292 = vpop.f32.mrb[0].mxu0
    %v293 = vpop.f32.mrb[0].mxu0
    %v294 = vadd.f32 0.0, %v293
    %v295 = vpop.f32.mrb[0].mxu0
    %296 = vmatprep.mubr.bf16.mxu0 %v135
    %297 = vmatmul.mubr.bf16.gmra.mrb[0].mxu0 %v134
    %v298 = vpop.f32.mrb[0].mxu0
    %v299 = vadd.f32 0.0, %v298
    %v300 = vpop.f32.mrb[0].mxu0
    %v301 = vpop.f32.mrb[0].mxu0
    %v302 = vadd.f32 0.0, %v301
    %v303 = vpop.f32.mrb[0].mxu0
    %304 = vdwg.mxu0
    %v305 = vadd.f32 %v56, %v275
    %v306 = vadd.f32 %v57, %v278
    %v307 = vadd.f32 %v58, %v283
    %v308 = vadd.f32 %v59, %v286
    %v309 = vadd.f32 %v60, %v291
    %v310 = vadd.f32 %v61, %v294
    %v311 = vadd.f32 %v62, %v299
    %v312 = vadd.f32 %v63, %v302
    %313 = vst [vmem:[#allocation2] sm:$0xff] %v305
    %314 = vst [vmem:[#allocation2 + $0x8] sm:$0xff] %v306
    %315 = vst [vmem:[#allocation2 + $0x10] sm:$0xff] %v307
    %316 = vst [vmem:[#allocation2 + $0x18] sm:$0xff] %v308
    %317 = vst [vmem:[#allocation2 + $0x20] sm:$0xff] %v309
    %318 = vst [vmem:[#allocation2 + $0x28] sm:$0xff] %v310
    %319 = vst [vmem:[#allocation2 + $0x30] sm:$0xff] %v311
    %320 = vst [vmem:[#allocation2 + $0x38] sm:$0xff] %v312
    // Predicated region
    $region26: #{tpu_custom_call.1} parent=1 // pred_check
      %p321 = pneg %p44
    $region27: #{tpu_custom_call.1} parent=1 // pred_check_branch
      %323 = sbr.rel (%p321) target = $region29
    $region28: #{tpu_custom_call.1} parent=1 // pred_region
      %v324 = vld [vmem:[#allocation2] sm:$0xff]
      %v325 = vld [vmem:[#allocation2 + $0x8] sm:$0xff]
      %v326 = vld [vmem:[#allocation2 + $0x10] sm:$0xff]
      %v327 = vld [vmem:[#allocation2 + $0x18] sm:$0xff]
      %v328 = vld [vmem:[#allocation2 + $0x20] sm:$0xff]
      %v329 = vld [vmem:[#allocation2 + $0x28] sm:$0xff]
      %v330 = vld [vmem:[#allocation2 + $0x30] sm:$0xff]
      %v331 = vld [vmem:[#allocation2 + $0x38] sm:$0xff]
      %v332 = vld [vmem:[%s2] sm:$0x1]
      %v334 = vlaneseq
      %v335 = vshrl.u32 %v334, 7
      %v336 = vsub.s32 0, %v335
      %v337 = vrot.slane %v332, %v336
      %v339 = vadd.f32 %v324, %v337
      %v340 = vadd.f32 %v325, %v337
      %v341 = vadd.f32 %v326, %v337
      %v342 = vadd.f32 %v327, %v337
      %v343 = vadd.f32 %v328, %v337
      %v344 = vadd.f32 %v329, %v337
      %v345 = vadd.f32 %v330, %v337
      %v346 = vadd.f32 %v331, %v337
      %v347 = vmax.f32 %v339, 0.0
      %v348 = vmax.f32 %v340, 0.0
      %v349 = vmax.f32 %v341, 0.0
      %v350 = vmax.f32 %v342, 0.0
      %v351 = vmax.f32 %v343, 0.0
      %v352 = vmax.f32 %v344, 0.0
      %v353 = vmax.f32 %v345, 0.0
      %v354 = vmax.f32 %v346, 0.0
      %v355 = vpack.c.bf16 %v348, %v347
      %v356 = vpack.c.bf16 %v350, %v349
      %v357 = vpack.c.bf16 %v352, %v351
      %v358 = vpack.c.bf16 %v354, %v353
      %v363 = vunpack.c.l.b16 %v355
      %v364 = vunpack.c.h.b16 %v355
      %v365 = vunpack.c.l.b16 %v356
      %v366 = vunpack.c.h.b16 %v356
      %v367 = vunpack.c.l.b16 %v357
      %v368 = vunpack.c.h.b16 %v357
      %v369 = vunpack.c.l.b16 %v358
      %v370 = vunpack.c.h.b16 %v358
      %v371 = vpack.c.b16 %v363, %v363
      %v372 = vpack.c.b16 %v364, %v364
      %v373 = vpack.c.b16 %v365, %v365
      %v374 = vpack.c.b16 %v366, %v366
      %v375 = vpack.c.b16 %v367, %v367
      %v376 = vpack.c.b16 %v368, %v368
      %v377 = vpack.c.b16 %v369, %v369
      %v378 = vpack.c.b16 %v370, %v370
      %387 = vst [vmem:[#allocation8] sm:$0xf] %v371
      %388 = vst [vmem:[#allocation8 + $0x4] sm:$0xf] %v372
      %389 = vst [vmem:[#allocation8 + $0x8] sm:$0xf] %v373
      %390 = vst [vmem:[#allocation8 + $0xc] sm:$0xf] %v374
      %391 = vst [vmem:[#allocation8 + $0x10] sm:$0xf] %v375
      %392 = vst [vmem:[#allocation8 + $0x14] sm:$0xf] %v376
      %393 = vst [vmem:[#allocation8 + $0x18] sm:$0xf] %v377
      %394 = vst [vmem:[#allocation8 + $0x1c] sm:$0xf] %v378
    $region29: #{tpu_custom_call.1} parent=1 // pred_fallthru
      _
    // Predicated region
    $region30: #{tpu_custom_call.1} parent=1 // pred_check
      _
    $region31: #{tpu_custom_call.1} parent=1 // pred_check_branch
      %396 = sbr.rel (0) target = $region33
    $region32: #{tpu_custom_call.1} parent=1 // pred_region
      %s398 = ssub.s32 512, 512
      %399 = vsyncadd [#allocation5], %s398
      %s400 = sshll.u32 [#allocation8], 4
      %s401 = int_to_ptr.vmem [resolvable:$true] %s400
      %406 = dma.vmem_to_hbm [thread:$0]  %s401, 512, %s3, [#allocation5], 64, 64, 4
    $region33: #{tpu_custom_call.1} parent=1 // pred_fallthru
      _
    // Predicated region
    $region34: #{tpu_custom_call.1} parent=1 // pred_check
      _
    $region35: #{tpu_custom_call.1} parent=1 // pred_check_branch
      %408 = sbr.rel (0) target = $region37
    $region36: #{tpu_custom_call.1} parent=1 // pred_region
      %409 = dma.done [#allocation5], 512
    $region37: #{tpu_custom_call.1} parent=1 // pred_fallthru
      _
    %410 = vsyncpa [#allocation4], 1
    %411 = vsyncpa [#allocation7], 1
    %412 = vsyncpa [#allocation5], 1

</llo_original>
